<compile_context>
chip_gen: v6e
topology: v6e:2x2x1
jax: 0.10.0
libtpu: 0.0.40
codegen_flags: <defaults>
</compile_context>

<pallas_src>
import functools

import jax
import jax.numpy as jnp
from jax.experimental import pallas as pl
from jax.experimental.pallas import tpu as pltpu

_INV_SQRT2 = 0.7071067811865476


def _round_up(x, m):
    return ((x + m - 1) // m) * m


def _gelu_exact_f32(x):
    # transformers' `gelu` for DistilBERT is the exact (erf-based) GELU.
    # Divide replaced by multiply with the constant 1/sqrt(2).
    x = x.astype(jnp.float32)
    return 0.5 * x * (1.0 + jax.lax.erf(x * jnp.float32(_INV_SQRT2)))


def ffn_kernel(x_ref, w1_ref, b1_ref, w2_ref, b2_ref, o_ref):
    # x_ref:  (tm, D) bf16   w1_ref: (D, H) bf16   b1_ref: (1, H) f32
    # w2_ref: (H, D) bf16    b2_ref: (1, D) f32    o_ref:  (tm, D) out dtype
    x = x_ref[...]
    # First matmul: bf16 x bf16 -> f32 accumulate on the MXU, bias in f32.
    h = jnp.dot(x, w1_ref[...], preferred_element_type=jnp.float32) + b1_ref[...]
    # Exact GELU in f32 on the VPU/EUP.
    h = _gelu_exact_f32(h)
    # Second matmul: cast activations back to bf16, f32 accumulate, f32 bias.
    y = jnp.dot(h.astype(w2_ref.dtype), w2_ref[...],
                preferred_element_type=jnp.float32) + b2_ref[...]
    # TODO(synk): dropout is identity in eval mode; training-mode dropout
    # (pltpu.prng_random_bits mask) is intentionally not applied here.
    o_ref[...] = y.astype(o_ref.dtype)


@functools.partial(jax.jit, static_argnames=("tm",))
def ffn_forward(x, w1_t, b1, w2_t, b2, *, tm=256):
    """x: (B, S, D); w1_t: (D, H); b1: (H,); w2_t: (H, D); b2: (D,).

    Weights/activations are cast to bf16 for the matmuls; accumulation and
    GELU stay in f32.  Rows are zero-padded up to the row tile, so any
    (B, S) works.  For full-size DistilBERT (H=3072) keep tm <= 256 so the
    (tm, H) f32 intermediate stays small; for larger tm add an H grid axis.
    """
    B, S, D = x.shape
    H = w1_t.shape[1]
    M = B * S

    compute_dtype = jnp.bfloat16
    out_dtype = x.dtype

    # Effective row tile: never bigger than the (8-aligned) row count, so tiny
    # demo shapes don't pad 16 rows up to 256.
    tm_eff = min(tm, _round_up(M, 8))
    M_pad = _round_up(M, tm_eff)

    x2d = x.reshape(M, D).astype(compute_dtype)
    if M_pad != M:
        x2d = jnp.pad(x2d, ((0, M_pad - M), (0, 0)))

    w1c = w1_t.astype(compute_dtype)
    w2c = w2_t.astype(compute_dtype)
    b1_2d = b1.reshape(1, H).astype(jnp.float32)
    b2_2d = b2.reshape(1, D).astype(jnp.float32)

    grid = (M_pad // tm_eff,)

    bytes_accessed = (
        x2d.size * x2d.dtype.itemsize
        + M_pad * D * jnp.dtype(out_dtype).itemsize
        + w1c.size * w1c.dtype.itemsize
        + w2c.size * w2c.dtype.itemsize
        + b1_2d.size * 4 + b2_2d.size * 4
    )
    cost = pl.CostEstimate(
        flops=4 * M_pad * D * H,          # two matmuls
        transcendentals=M_pad * H,        # erf per hidden activation
        bytes_accessed=bytes_accessed,
    )

    out2d = pl.pallas_call(
        ffn_kernel,
        out_shape=jax.ShapeDtypeStruct((M_pad, D), out_dtype),
        grid_spec=pltpu.PrefetchScalarGridSpec(
            num_scalar_prefetch=0,
            grid=grid,
            in_specs=[
                pl.BlockSpec((tm_eff, D), lambda i: (i, 0)),   # x rows
                # Weights/biases are resident (constant block index), so they
                # are fetched once.  For full-size DistilBERT weights on v7x
                # (64 MiB VMEM), add pipeline_mode=pl.Buffered(1) here to
                # avoid allocating a second buffer for the constant blocks.
                pl.BlockSpec((D, H), lambda i: (0, 0)),        # W1^T
                pl.BlockSpec((1, H), lambda i: (0, 0)),        # b1
                pl.BlockSpec((H, D), lambda i: (0, 0)),        # W2^T
                pl.BlockSpec((1, D), lambda i: (0, 0)),        # b2
            ],
            out_specs=pl.BlockSpec((tm_eff, D), lambda i: (i, 0)),
        ),
        compiler_params=pltpu.CompilerParams(
            dimension_semantics=("parallel",),
            vmem_limit_bytes=64 * 1024 * 1024,
        ),
        cost_estimate=cost,
    )(x2d, w1c, b1_2d, w2c, b2_2d)

    return out2d[:M].reshape(B, S, D)


def _reference(x, w1_t, b1, w2_t, b2):
    # Same precision recipe as the kernel: bf16 matmul inputs, f32 accumulate,
    # f32 GELU and bias adds.
    xb = x.astype(jnp.bfloat16)
    w1b = w1_t.astype(jnp.bfloat16)
    w2b = w2_t.astype(jnp.bfloat16)
    h = jnp.einsum("bsd,dh->bsh", xb, w1b,
                   preferred_element_type=jnp.float32) + b1.astype(jnp.float32)
    h = _gelu_exact_f32(h)
    y = jnp.einsum("bsh,hd->bsd", h.astype(jnp.bfloat16), w2b,
                   preferred_element_type=jnp.float32) + b2.astype(jnp.float32)
    return y.astype(x.dtype)


if __name__ == "__main__":
    # config: dim=128, hidden_dim=256, activation='gelu', dropout (eval=identity),
    # chunk_size_feed_forward=0
    B, S, D, H = 2, 8, 128, 256
    key = jax.random.PRNGKey(0)
    kx, kw1, kb1, kw2, kb2 = jax.random.split(key, 5)

    x = jax.random.normal(kx, (B, S, D), dtype=jnp.float32)

    # nn.Linear(dim, hidden): weight (H, D), bias (H,)  -> pass transposed (D, H)
    lin1_w = jax.random.normal(kw1, (H, D), dtype=jnp.float32) * 0.02
    lin1_b = jax.random.normal(kb1, (H,), dtype=jnp.float32) * 0.02
    # nn.Linear(hidden, dim): weight (D, H), bias (D,)  -> pass transposed (H, D)
    lin2_w = jax.random.normal(kw2, (D, H), dtype=jnp.float32) * 0.02
    lin2_b = jax.random.normal(kb2, (D,), dtype=jnp.float32) * 0.02

    w1_t = lin1_w.T  # (D, H)
    w2_t = lin2_w.T  # (H, D)

    out = ffn_forward(x, w1_t, lin1_b, w2_t, lin2_b, tm=256)
    out = jax.block_until_ready(out)

    ref = _reference(x, w1_t, lin1_b, w2_t, lin2_b)
    assert out.shape == (B, S, D)
    # bf16 matmul inputs -> slightly looser tolerance than pure f32.
    assert jnp.allclose(out, ref, atol=1e-2, rtol=1e-2), "mismatch vs reference"

    print("KERNEL_OK")
</pallas_src>

<mosaic_0001>
module attributes {stable_mosaic.version = 11 : i64} {
  func.func @ffn_kernel(%arg0: i32, %arg1: memref<16x128xbf16, #tpu.memory_space<vmem>>, %arg2: memref<128x256xbf16, #tpu.memory_space<vmem>>, %arg3: memref<1x256xf32, #tpu.memory_space<vmem>>, %arg4: memref<256x128xbf16, #tpu.memory_space<vmem>>, %arg5: memref<1x128xf32, #tpu.memory_space<vmem>>, %arg6: memref<16x128xf32, #tpu.memory_space<vmem>>) attributes {dimension_semantics = [#tpu.dimension_semantics<parallel>], iteration_bounds = array<i64: 1>, scalar_prefetch = 0 : i64, scratch_operands = 0 : i64, tpu.core_type = #tpu.core_type<tc>, window_params = [{transform_indices = @transform_0, window_bounds = array<i64: 16, 128>}, {pipeline_mode = #tpu.pipeline_mode<synchronous>, transform_indices = @transform_1, window_bounds = array<i64: 128, 256>}, {pipeline_mode = #tpu.pipeline_mode<synchronous>, transform_indices = @transform_2, window_bounds = array<i64: 1, 256>}, {pipeline_mode = #tpu.pipeline_mode<synchronous>, transform_indices = @transform_3, window_bounds = array<i64: 256, 128>}, {pipeline_mode = #tpu.pipeline_mode<synchronous>, transform_indices = @transform_4, window_bounds = array<i64: 1, 128>}, {transform_indices = @transform_5, window_bounds = array<i64: 16, 128>}]} {
    %c0 = arith.constant 0 : index
    %c0_0 = arith.constant 0 : index
    %0 = vector.load %arg1[%c0, %c0_0] : memref<16x128xbf16, #tpu.memory_space<vmem>>, vector<16x128xbf16>
    %c0_1 = arith.constant 0 : index
    %c0_2 = arith.constant 0 : index
    %1 = vector.load %arg2[%c0_1, %c0_2] : memref<128x256xbf16, #tpu.memory_space<vmem>>, vector<128x256xbf16>
    %cst = arith.constant dense<0.000000e+00> : vector<16x256xf32>
    %2 = tpu.matmul %0, %1, %cst {dimension_numbers = #tpu.dot_dimension_numbers<[1], [0], [0], [1], [0, 0, 1, 1], [], []>} : vector<16x128xbf16>, vector<128x256xbf16>, vector<16x256xf32> -> vector<16x256xf32>
    %c0_3 = arith.constant 0 : index
    %c0_4 = arith.constant 0 : index
    %3 = vector.load %arg3[%c0_3, %c0_4] : memref<1x256xf32, #tpu.memory_space<vmem>>, vector<1x256xf32>
    %4 = vector.broadcast %3 : vector<1x256xf32> to vector<16x256xf32>
    %5 = arith.addf %2, %4 : vector<16x256xf32>
    %cst_5 = arith.constant 5.000000e-01 : f32
    %6 = vector.broadcast %cst_5 : f32 to vector<16x256xf32>
    %7 = arith.mulf %6, %5 : vector<16x256xf32>
    %cst_6 = arith.constant 0.707106769 : f32
    %8 = vector.broadcast %cst_6 : f32 to vector<16x256xf32>
    %9 = arith.mulf %5, %8 : vector<16x256xf32>
    %10 = math.erf %9 : vector<16x256xf32>
    %cst_7 = arith.constant 1.000000e+00 : f32
    %11 = vector.broadcast %cst_7 : f32 to vector<16x256xf32>
    %12 = arith.addf %11, %10 : vector<16x256xf32>
    %13 = arith.mulf %7, %12 : vector<16x256xf32>
    %14 = arith.truncf %13 : vector<16x256xf32> to vector<16x256xbf16>
    %c0_8 = arith.constant 0 : index
    %c0_9 = arith.constant 0 : index
    %15 = vector.load %arg4[%c0_8, %c0_9] : memref<256x128xbf16, #tpu.memory_space<vmem>>, vector<256x128xbf16>
    %cst_10 = arith.constant dense<0.000000e+00> : vector<16x128xf32>
    %16 = tpu.matmul %14, %15, %cst_10 {dimension_numbers = #tpu.dot_dimension_numbers<[1], [0], [0], [1], [0, 0, 1, 1], [], []>} : vector<16x256xbf16>, vector<256x128xbf16>, vector<16x128xf32> -> vector<16x128xf32>
    %c0_11 = arith.constant 0 : index
    %c0_12 = arith.constant 0 : index
    %17 = vector.load %arg5[%c0_11, %c0_12] : memref<1x128xf32, #tpu.memory_space<vmem>>, vector<1x128xf32>
    %18 = vector.broadcast %17 : vector<1x128xf32> to vector<16x128xf32>
    %19 = arith.addf %16, %18 : vector<16x128xf32>
    %c0_13 = arith.constant 0 : index
    %c0_14 = arith.constant 0 : index
    %20 = vector.load %arg6[%c0_13, %c0_14] : memref<16x128xf32, #tpu.memory_space<vmem>>, vector<16x128xf32>
    tpu.vector_store %arg6[%c0_13, %c0_14], %19 {strides = array<i32>} : memref<16x128xf32, #tpu.memory_space<vmem>>, vector<16x128xf32>,
    return
  }
  func.func @transform_0(%arg0: i32) -> (i32, i32) {
    %c0_i32 = arith.constant 0 : i32
    %c0_i32_0 = arith.constant 0 : i32
    return %arg0, %c0_i32 : i32, i32
  }
  func.func @transform_1(%arg0: i32) -> (i32, i32) {
    %c0_i32 = arith.constant 0 : i32
    %c0_i32_0 = arith.constant 0 : i32
    %c0_i32_1 = arith.constant 0 : i32
    return %c0_i32, %c0_i32_0 : i32, i32
  }
  func.func @transform_2(%arg0: i32) -> (i32, i32) {
    %c0_i32 = arith.constant 0 : i32
    %c0_i32_0 = arith.constant 0 : i32
    %c0_i32_1 = arith.constant 0 : i32
    return %c0_i32, %c0_i32_0 : i32, i32
  }
  func.func @transform_3(%arg0: i32) -> (i32, i32) {
    %c0_i32 = arith.constant 0 : i32
    %c0_i32_0 = arith.constant 0 : i32
    %c0_i32_1 = arith.constant 0 : i32
    return %c0_i32, %c0_i32_0 : i32, i32
  }
  func.func @transform_4(%arg0: i32) -> (i32, i32) {
    %c0_i32 = arith.constant 0 : i32
    %c0_i32_0 = arith.constant 0 : i32
    %c0_i32_1 = arith.constant 0 : i32
    return %c0_i32, %c0_i32_0 : i32, i32
  }
  func.func @transform_5(%arg0: i32) -> (i32, i32) {
    %c0_i32 = arith.constant 0 : i32
    %c0_i32_0 = arith.constant 0 : i32
    return %arg0, %c0_i32 : i32, i32
  }
}

</mosaic_0001>

<llo_original>
// kernel: ffn_forward.1
$region0: #{ffn_forward.1}
  #allocation0 [shape = 'u32[]', space=smem, size = 0x4, offset = 0x4, fixed_abs, tag = 'smem constant byte address 0x4 - core index']
  #allocation1 [shape = 'u32[144,128]{1,0:T(1,128)}', space=vmem, size = 0x12000, scoped, tag = 'internal scratch']
  %s0 = inlined_call_operand.vmem [shape: bf16[16,128], index: 0, kind: input, shape index: {}]
  %s1 = inlined_call_operand.vmem [shape: bf16[128,256], index: 1, kind: input, shape index: {}]
  %s2 = inlined_call_operand.vmem [shape: f32[1,256], index: 2, kind: input, shape index: {}]
  %s3 = inlined_call_operand.vmem [shape: bf16[256,128], index: 3, kind: input, shape index: {}]
  %s4 = inlined_call_operand.vmem [shape: f32[1,128], index: 4, kind: input, shape index: {}]
  %s5 = inlined_call_operand.hbm [shape: f32[16,128], index: 5, kind: output, shape index: {}]
  %s6 = sld [smem:[#allocation0]]
  $region30: #{ffn_forward.1} parent=0
    _
  %s8 = ssub.s32 1, %s6
  %s9 = scalar_select 0, %s8, %s6
  $region1: #{ffn_forward.1} parent=0
    #allocation2 [shape = 'u8[8192]{0}', space=vmem, size = 0x2000, scoped, tag = 'output window, operand 0, single buffered']
    #allocation3 [shape = 's32[1]{0}', space=sflag, size = 0x4, scoped, tag = 'scoped memory for ffn_forward.1']
    %10 = vsyncpa [#allocation3], 0
    // Predicated region
    $region2: #{ffn_forward.1} parent=1 // pred_check
      _
    $region3: #{ffn_forward.1} parent=1 // pred_check_branch
      %12 = sbr.rel (0) target = $region5
    $region4: #{ffn_forward.1} parent=1 // pred_region
      _
    $region5: #{ffn_forward.1} parent=1 // pred_fallthru
      _
    // Predicated region
    $region6: #{ffn_forward.1} parent=1 // pred_check
      _
    $region7: #{ffn_forward.1} parent=1 // pred_check_branch
      %14 = sbr.rel (0) target = $region9
    $region8: #{ffn_forward.1} parent=1 // pred_region
      _
    $region9: #{ffn_forward.1} parent=1 // pred_fallthru
      _
    // Predicated region
    $region10: #{ffn_forward.1} parent=1 // pred_check
      _
    $region11: #{ffn_forward.1} parent=1 // pred_check_branch
      %16 = sbr.rel (0) target = $region13
    $region12: #{ffn_forward.1} parent=1 // pred_region
      _
    $region13: #{ffn_forward.1} parent=1 // pred_fallthru
      _
    // Predicated region
    $region14: #{ffn_forward.1} parent=1 // pred_check
      _
    $region15: #{ffn_forward.1} parent=1 // pred_check_branch
      %18 = sbr.rel (0) target = $region17
    $region16: #{ffn_forward.1} parent=1 // pred_region
      _
    $region17: #{ffn_forward.1} parent=1 // pred_fallthru
      _
    // Predicated region
    $region18: #{ffn_forward.1} parent=1 // pred_check
      _
    $region19: #{ffn_forward.1} parent=1 // pred_check_branch
      %20 = sbr.rel (0) target = $region21
    $region20: #{ffn_forward.1} parent=1 // pred_region
      _
    $region21: #{ffn_forward.1} parent=1 // pred_fallthru
      _
    %v22 = vld [vmem:[%s0] sm:$0xf]
    %v23 = vld [vmem:[%s0 + $0x4] sm:$0xf]
    %v24 = vld [vmem:[%s1] sm:$0xff]
    %v25 = vld [vmem:[%s1 + $0x8] sm:$0xff]
    %v26 = vld [vmem:[%s1 + $0x10] sm:$0xff]
    %v27 = vld [vmem:[%s1 + $0x18] sm:$0xff]
    %v28 = vld [vmem:[%s1 + $0x20] sm:$0xff]
    %v29 = vld [vmem:[%s1 + $0x28] sm:$0xff]
    %v30 = vld [vmem:[%s1 + $0x30] sm:$0xff]
    %v31 = vld [vmem:[%s1 + $0x38] sm:$0xff]
    %v32 = vld [vmem:[%s1 + $0x40] sm:$0xff]
    %v33 = vld [vmem:[%s1 + $0x48] sm:$0xff]
    %v34 = vld [vmem:[%s1 + $0x50] sm:$0xff]
    %v35 = vld [vmem:[%s1 + $0x58] sm:$0xff]
    %v36 = vld [vmem:[%s1 + $0x60] sm:$0xff]
    %v37 = vld [vmem:[%s1 + $0x68] sm:$0xff]
    %v38 = vld [vmem:[%s1 + $0x70] sm:$0xff]
    %v39 = vld [vmem:[%s1 + $0x78] sm:$0xff]
    %v40 = vld [vmem:[%s2] sm:$0x3]
    %v42 = vlaneseq
    %v43 = vshrl.u32 %v42, 7
    %v44 = vsub.s32 0, %v43
    %v45 = vrot.slane %v40, %v44
    %v46 = vlaneseq
    %v47 = vshrl.u32 %v46, 7
    %v48 = vsub.s32 1, %v47
    %v49 = vrot.slane %v40, %v48
    %v54 = vunpack.c.l.b16 %v22
    %v55 = vunpack.c.l.b16 %v23
    %v56 = vpack.c.b16 %v55, %v54
    %v74 = vunpack.c.l.b16 %v24
    %v75 = vunpack.c.h.b16 %v24
    %v76 = vunpack.c.l.b16 %v25
    %v77 = vunpack.c.h.b16 %v25
    %v78 = vunpack.c.l.b16 %v26
    %v79 = vunpack.c.h.b16 %v26
    %v80 = vunpack.c.l.b16 %v27
    %v81 = vunpack.c.h.b16 %v27
    %v82 = vunpack.c.l.b16 %v28
    %v83 = vunpack.c.h.b16 %v28
    %v84 = vunpack.c.l.b16 %v29
    %v85 = vunpack.c.h.b16 %v29
    %v86 = vunpack.c.l.b16 %v30
    %v87 = vunpack.c.h.b16 %v30
    %v88 = vunpack.c.l.b16 %v31
    %v89 = vunpack.c.h.b16 %v31
    %v90 = vunpack.c.l.b16 %v32
    %v91 = vunpack.c.h.b16 %v32
    %v92 = vunpack.c.l.b16 %v33
    %v93 = vunpack.c.h.b16 %v33
    %v94 = vunpack.c.l.b16 %v34
    %v95 = vunpack.c.h.b16 %v34
    %v96 = vunpack.c.l.b16 %v35
    %v97 = vunpack.c.h.b16 %v35
    %v98 = vunpack.c.l.b16 %v36
    %v99 = vunpack.c.h.b16 %v36
    %v100 = vunpack.c.l.b16 %v37
    %v101 = vunpack.c.h.b16 %v37
    %v102 = vunpack.c.l.b16 %v38
    %v103 = vunpack.c.h.b16 %v38
    %v104 = vunpack.c.l.b16 %v39
    %v105 = vunpack.c.h.b16 %v39
    %v106 = vpack.c.b16 %v76, %v74
    %v107 = vpack.c.b16 %v77, %v75
    %v108 = vpack.c.b16 %v80, %v78
    %v109 = vpack.c.b16 %v81, %v79
    %v110 = vpack.c.b16 %v84, %v82
    %v111 = vpack.c.b16 %v85, %v83
    %v112 = vpack.c.b16 %v88, %v86
    %v113 = vpack.c.b16 %v89, %v87
    %v114 = vpack.c.b16 %v92, %v90
    %v115 = vpack.c.b16 %v93, %v91
    %v116 = vpack.c.b16 %v96, %v94
    %v117 = vpack.c.b16 %v97, %v95
    %v118 = vpack.c.b16 %v100, %v98
    %v119 = vpack.c.b16 %v101, %v99
    %v120 = vpack.c.b16 %v104, %v102
    %v121 = vpack.c.b16 %v105, %v103
    %138 = vmatprep.subr.bf16.mxu0 %v121
    %139 = vmatpush1.bf16.msra.mxu0 %v120
    %140 = vmatprep.subr.bf16.mxu0 %v119
    %141 = vmatpush1.bf16.msra.mxu0 %v118
    %142 = vmatprep.subr.bf16.mxu0 %v117
    %143 = vmatpush1.bf16.msra.mxu0 %v116
    %144 = vmatprep.subr.bf16.mxu0 %v115
    %145 = vmatpush1.bf16.msra.mxu0 %v114
    %146 = vmatprep.subr.bf16.mxu0 %v113
    %147 = vmatpush1.bf16.msra.mxu0 %v112
    %148 = vmatprep.subr.bf16.mxu0 %v111
    %149 = vmatpush1.bf16.msra.mxu0 %v110
    %150 = vmatprep.subr.bf16.mxu0 %v109
    %151 = vmatpush1.bf16.msra.mxu0 %v108
    %152 = vmatprep.subr.bf16.mxu0 %v107
    %153 = vmatpush1.bf16.msra.mxu0 %v106
    %154 = vmatprep.subr.bf16.mxu0 0
    %155 = vmatpush2.bf16.msra.mxu0 0
    %156 = vmatprep.subr.bf16.mxu0 0
    %157 = vmatpush2.bf16.msra.mxu0 0
    %158 = vmatprep.subr.bf16.mxu0 0
    %159 = vmatpush2.bf16.msra.mxu0 0
    %160 = vmatprep.subr.bf16.mxu0 0
    %161 = vmatpush2.bf16.msra.mxu0 0
    %162 = vmatprep.subr.bf16.mxu0 0
    %163 = vmatpush2.bf16.msra.mxu0 0
    %164 = vmatprep.subr.bf16.mxu0 0
    %165 = vmatpush2.bf16.msra.mxu0 0
    %166 = vmatprep.subr.bf16.mxu0 0
    %167 = vmatpush2.bf16.msra.mxu0 0
    %168 = vmatprep.subr.bf16.mxu0 0
    %169 = vmatpush2.bf16.msra.mxu0 0
    %170 = vmatprep.mubr.bf16.mxu0 0
    %171 = vmatmul.mubr.bf16.gmra.mxu0 %v56
    %v172 = vpop.f32.mrf.mxu0
    %v173 = vadd.f32 %v45, %v172
    %v174 = vpop.f32.mrf.mxu0
    %v175 = vadd.f32 %v49, %v174
    %v176 = vpop.f32.mrf.mxu0
    %v177 = vadd.f32 %v45, %v176
    %v178 = vpop.f32.mrf.mxu0
    %v179 = vadd.f32 %v49, %v178
    %180 = vdwg.mxu0
    %v181 = vmul.f32 %v173, 0.5
    %v182 = vmul.f32 %v175, 0.5
    %v183 = vmul.f32 %v177, 0.5
    %v184 = vmul.f32 %v179, 0.5
    %v185 = vmul.f32 %v173, 0.70710677
    %v186 = vmul.f32 %v175, 0.70710677
    %v187 = vmul.f32 %v177, 0.70710677
    %v188 = vmul.f32 %v179, 0.70710677
    %v189 = verf.f32.pop %v185
    %v190 = verf.f32.pop %v186
    %v191 = verf.f32.pop %v187
    %v192 = verf.f32.pop %v188
    %v193 = vadd.f32 %v189, 1.0
    %v194 = vadd.f32 %v190, 1.0
    %v195 = vadd.f32 %v191, 1.0
    %v196 = vadd.f32 %v192, 1.0
    %v197 = vmul.f32 %v181, %v193
    %v198 = vmul.f32 %v182, %v194
    %v199 = vmul.f32 %v183, %v195
    %v200 = vmul.f32 %v184, %v196
    %v201 = vpack.c.bf16 %v199, %v197
    %v202 = vpack.c.bf16 %v200, %v198
    %v203 = vld [vmem:[%s3] sm:$0xf]
    %v204 = vld [vmem:[%s3 + $0x4] sm:$0xf]
    %v205 = vld [vmem:[%s3 + $0x8] sm:$0xf]
    %v206 = vld [vmem:[%s3 + $0xc] sm:$0xf]
    %v207 = vld [vmem:[%s3 + $0x10] sm:$0xf]
    %v208 = vld [vmem:[%s3 + $0x14] sm:$0xf]
    %v209 = vld [vmem:[%s3 + $0x18] sm:$0xf]
    %v210 = vld [vmem:[%s3 + $0x1c] sm:$0xf]
    %v211 = vld [vmem:[%s3 + $0x20] sm:$0xf]
    %v212 = vld [vmem:[%s3 + $0x24] sm:$0xf]
    %v213 = vld [vmem:[%s3 + $0x28] sm:$0xf]
    %v214 = vld [vmem:[%s3 + $0x2c] sm:$0xf]
    %v215 = vld [vmem:[%s3 + $0x30] sm:$0xf]
    %v216 = vld [vmem:[%s3 + $0x34] sm:$0xf]
    %v217 = vld [vmem:[%s3 + $0x38] sm:$0xf]
    %v218 = vld [vmem:[%s3 + $0x3c] sm:$0xf]
    %v219 = vld [vmem:[%s3 + $0x40] sm:$0xf]
    %v220 = vld [vmem:[%s3 + $0x44] sm:$0xf]
    %v221 = vld [vmem:[%s3 + $0x48] sm:$0xf]
    %v222 = vld [vmem:[%s3 + $0x4c] sm:$0xf]
    %v223 = vld [vmem:[%s3 + $0x50] sm:$0xf]
    %v224 = vld [vmem:[%s3 + $0x54] sm:$0xf]
    %v225 = vld [vmem:[%s3 + $0x58] sm:$0xf]
    %v226 = vld [vmem:[%s3 + $0x5c] sm:$0xf]
    %v227 = vld [vmem:[%s3 + $0x60] sm:$0xf]
    %v228 = vld [vmem:[%s3 + $0x64] sm:$0xf]
    %v229 = vld [vmem:[%s3 + $0x68] sm:$0xf]
    %v230 = vld [vmem:[%s3 + $0x6c] sm:$0xf]
    %v231 = vld [vmem:[%s3 + $0x70] sm:$0xf]
    %v232 = vld [vmem:[%s3 + $0x74] sm:$0xf]
    %v233 = vld [vmem:[%s3 + $0x78] sm:$0xf]
    %v234 = vld [vmem:[%s3 + $0x7c] sm:$0xf]
    %v235 = vld [vmem:[%s4] sm:$0x1]
    %v237 = vlaneseq
    %v238 = vshrl.u32 %v237, 7
    %v239 = vsub.s32 0, %v238
    %v240 = vrot.slane %v235, %v239
    %v274 = vunpack.c.l.b16 %v203
    %v275 = vunpack.c.l.b16 %v204
    %v276 = vunpack.c.l.b16 %v205
    %v277 = vunpack.c.l.b16 %v206
    %v278 = vunpack.c.l.b16 %v207
    %v279 = vunpack.c.l.b16 %v208
    %v280 = vunpack.c.l.b16 %v209
    %v281 = vunpack.c.l.b16 %v210
    %v282 = vunpack.c.l.b16 %v211
    %v283 = vunpack.c.l.b16 %v212
    %v284 = vunpack.c.l.b16 %v213
    %v285 = vunpack.c.l.b16 %v214
    %v286 = vunpack.c.l.b16 %v215
    %v287 = vunpack.c.l.b16 %v216
    %v288 = vunpack.c.l.b16 %v217
    %v289 = vunpack.c.l.b16 %v218
    %v290 = vunpack.c.l.b16 %v219
    %v291 = vunpack.c.l.b16 %v220
    %v292 = vunpack.c.l.b16 %v221
    %v293 = vunpack.c.l.b16 %v222
    %v294 = vunpack.c.l.b16 %v223
    %v295 = vunpack.c.l.b16 %v224
    %v296 = vunpack.c.l.b16 %v225
    %v297 = vunpack.c.l.b16 %v226
    %v298 = vunpack.c.l.b16 %v227
    %v299 = vunpack.c.l.b16 %v228
    %v300 = vunpack.c.l.b16 %v229
    %v301 = vunpack.c.l.b16 %v230
    %v302 = vunpack.c.l.b16 %v231
    %v303 = vunpack.c.l.b16 %v232
    %v304 = vunpack.c.l.b16 %v233
    %v305 = vunpack.c.l.b16 %v234
    %v306 = vpack.c.b16 %v275, %v274
    %v307 = vpack.c.b16 %v277, %v276
    %v308 = vpack.c.b16 %v279, %v278
    %v309 = vpack.c.b16 %v281, %v280
    %v310 = vpack.c.b16 %v283, %v282
    %v311 = vpack.c.b16 %v285, %v284
    %v312 = vpack.c.b16 %v287, %v286
    %v313 = vpack.c.b16 %v289, %v288
    %v314 = vpack.c.b16 %v291, %v290
    %v315 = vpack.c.b16 %v293, %v292
    %v316 = vpack.c.b16 %v295, %v294
    %v317 = vpack.c.b16 %v297, %v296
    %v318 = vpack.c.b16 %v299, %v298
    %v319 = vpack.c.b16 %v301, %v300
    %v320 = vpack.c.b16 %v303, %v302
    %v321 = vpack.c.b16 %v305, %v304
    %338 = vmatprep.subr.bf16.mxu0 0
    %339 = vmatpush1.bf16.msra.mxu0 %v313
    %340 = vmatprep.subr.bf16.mxu0 0
    %341 = vmatpush1.bf16.msra.mxu0 %v312
    %342 = vmatprep.subr.bf16.mxu0 0
    %343 = vmatpush1.bf16.msra.mxu0 %v311
    %344 = vmatprep.subr.bf16.mxu0 0
    %345 = vmatpush1.bf16.msra.mxu0 %v310
    %346 = vmatprep.subr.bf16.mxu0 0
    %347 = vmatpush1.bf16.msra.mxu0 %v309
    %348 = vmatprep.subr.bf16.mxu0 0
    %349 = vmatpush1.bf16.msra.mxu0 %v308
    %350 = vmatprep.subr.bf16.mxu0 0
    %351 = vmatpush1.bf16.msra.mxu0 %v307
    %352 = vmatprep.subr.bf16.mxu0 0
    %353 = vmatpush1.bf16.msra.mxu0 %v306
    %354 = vmatprep.subr.bf16.mxu0 0
    %355 = vmatpush2.bf16.msra.mxu0 %v321
    %356 = vmatprep.subr.bf16.mxu0 0
    %357 = vmatpush2.bf16.msra.mxu0 %v320
    %358 = vmatprep.subr.bf16.mxu0 0
    %359 = vmatpush2.bf16.msra.mxu0 %v319
    %360 = vmatprep.subr.bf16.mxu0 0
    %361 = vmatpush2.bf16.msra.mxu0 %v318
    %362 = vmatprep.subr.bf16.mxu0 0
    %363 = vmatpush2.bf16.msra.mxu0 %v317
    %364 = vmatprep.subr.bf16.mxu0 0
    %365 = vmatpush2.bf16.msra.mxu0 %v316
    %366 = vmatprep.subr.bf16.mxu0 0
    %367 = vmatpush2.bf16.msra.mxu0 %v315
    %368 = vmatprep.subr.bf16.mxu0 0
    %369 = vmatpush2.bf16.msra.mxu0 %v314
    %370 = vmatprep.mubr.bf16.mxu0 %v202
    %371 = vmatmul.mubr.bf16.gmra.mxu0 %v201
    %v372 = vpop.f32.mrf.mxu0
    %v373 = vadd.f32 %v240, %v372
    %v374 = vpop.f32.mrf.mxu0
    %v375 = vpop.f32.mrf.mxu0
    %v376 = vadd.f32 %v240, %v375
    %v377 = vpop.f32.mrf.mxu0
    %378 = vdwg.mxu0
    %379 = vst [vmem:[#allocation2] sm:$0xff] %v373
    %380 = vst [vmem:[#allocation2 + $0x8] sm:$0xff] %v376
    // Predicated region
    $region22: #{ffn_forward.1} parent=1 // pred_check
      _
    $region23: #{ffn_forward.1} parent=1 // pred_check_branch
      %382 = sbr.rel (0) target = $region25
    $region24: #{ffn_forward.1} parent=1 // pred_region
      %s384 = ssub.s32 256, 256
      %385 = vsyncadd [#allocation3], %s384
      %s386 = sshll.u32 [#allocation2], 4
      %s387 = int_to_ptr.vmem [resolvable:$true] %s386
      %392 = dma.vmem_to_hbm [thread:$0]  %s387, 256, %s5, [#allocation3], 128, 128, 8
    $region25: #{ffn_forward.1} parent=1 // pred_fallthru
      _
    // Predicated region
    $region26: #{ffn_forward.1} parent=1 // pred_check
      _
    $region27: #{ffn_forward.1} parent=1 // pred_check_branch
      %394 = sbr.rel (0) target = $region29
    $region28: #{ffn_forward.1} parent=1 // pred_region
      %395 = dma.done [#allocation3], 256
    $region29: #{ffn_forward.1} parent=1 // pred_fallthru
      _
    %396 = vsyncpa [#allocation3], 1

</llo_original>
